<compile_context>
chip_gen: v7x
topology: tpu7x:2x2x1
jax: 0.10.0
libtpu: 0.0.40
codegen_flags: <defaults>
</compile_context>

<pallas_src>
import functools

import jax
import jax.numpy as jnp
from jax.experimental import pallas as pl
from jax.experimental.pallas import tpu as pltpu

LANE = 128          # hidden / action dims padded to one lane-dense tile
SUBLANE = 8         # f32 sublane multiple used for batch tiling
_TILE_CAP = 8192    # max batch rows per grid step (VMEM budget: (8192,128) f32 = 4 MiB/block)
_SMALL_BATCH = 64   # at or below this, run a single un-padded grid step


def _round_up(x, m):
    return ((x + m - 1) // m) * m


def _pad2(x, rows, cols):
    r, c = x.shape
    return jnp.pad(x, ((0, rows - r), (0, cols - c)))


def _pad1(x, cols):
    return jnp.pad(x, (0, cols - x.shape[0]))


def _batch_tiling(batch):
    """Pick (padded_batch, batch_tile). Tile count is even when > 1 (v7x megacore)."""
    if batch <= _SMALL_BATCH:
        return batch, batch                      # single step, block dims == array dims, no pad
    bp = _round_up(batch, SUBLANE)
    n_tiles = max(2, pl.cdiv(bp, _TILE_CAP))
    if n_tiles % 2:
        n_tiles += 1                             # even tile count so v7x's 2 TCs stay balanced
    tb = _round_up(pl.cdiv(bp, n_tiles), SUBLANE)
    return n_tiles * tb, tb


# ---------------------------------------------------------------------------
# Kernels
# ---------------------------------------------------------------------------

def _mlp_block(x, w1, w23, b, out_dtype):
    # x: (tb, state_size); w1: (state_size, 128); w23: (2, 128, 128); b: (3, 128)
    h = jnp.dot(x, w1, preferred_element_type=jnp.float32)
    h = jnp.maximum(h + b[0:1, :], 0.0)                      # fc1 + relu
    h = jnp.dot(h, w23[0], preferred_element_type=jnp.float32)
    h = jnp.maximum(h + b[1:2, :], 0.0)                      # fc2 + relu
    out = jnp.dot(h, w23[1], preferred_element_type=jnp.float32) + b[2:3, :]   # fc3
    return out.astype(out_dtype)                             # cast only at the store


def _dqn_kernel(x_ref, w1_ref, w23_ref, b_ref, o_ref):
    o_ref[...] = _mlp_block(x_ref[...], w1_ref[...], w23_ref[...], b_ref[...], o_ref.dtype)


def _dqn_kernel_stacked(x_ref, w1_ref, w23_ref, b_ref, o_ref):
    # Leading size-1 block dim selects which parameter set this grid step uses.
    o_ref[0] = _mlp_block(x_ref[...], w1_ref[0], w23_ref[0], b_ref[0], o_ref.dtype)


# ---------------------------------------------------------------------------
# Parameter packing (done once, outside the per-forward path)
# ---------------------------------------------------------------------------

def pack_dqn_params(params):
    """Pad + pack DQN params ONCE (after init / each optimizer step, not per forward).

    params = (w1, b1, w2, b2, w3, b3), weights stored as (in_features, out_features).
    Returns:
      w1_p : (state_size, 128) f32   -- no contraction-dim padding (kernel handles K<8)
      w23_p: (2, 128, 128) f32       -- [fc2 | fc3]
      b_p  : (3, 128) f32            -- [b1 | b2 | b3]
    Zero padding keeps padded hidden/action columns exactly 0 through ReLU layers.
    """
    w1, b1, w2, b2, w3, b3 = params
    state_size, hidden = w1.shape
    action_size = w3.shape[1]
    assert hidden <= LANE and action_size <= LANE, "hidden/action dims must be <= 128"
    w1_p = _pad2(jnp.asarray(w1, jnp.float32), state_size, LANE)
    w23_p = jnp.stack([_pad2(jnp.asarray(w2, jnp.float32), LANE, LANE),
                       _pad2(jnp.asarray(w3, jnp.float32), LANE, LANE)])
    b_p = jnp.stack([_pad1(jnp.asarray(b1, jnp.float32), LANE),
                     _pad1(jnp.asarray(b2, jnp.float32), LANE),
                     _pad1(jnp.asarray(b3, jnp.float32), LANE)])
    return w1_p, w23_p, b_p


def stack_packed_params(packed_list):
    """Stack N packed parameter sets (e.g. [online, target]) along a new leading axis."""
    return tuple(jnp.stack(arrs) for arrs in zip(*packed_list))


# ---------------------------------------------------------------------------
# Forward wrappers
# ---------------------------------------------------------------------------

@functools.partial(jax.jit, static_argnames=("action_size", "out_dtype"))
def dqn_forward(state, packed_params, *, action_size, out_dtype=jnp.float32):
    """state: (B, state_size) float32. Returns (B, action_size) Q-values in `out_dtype`."""
    w1_p, w23_p, b_p = packed_params
    B, state_size = state.shape
    assert w1_p.shape[0] == state_size, "state width does not match packed params"

    bp, tb = _batch_tiling(B)
    x = state.astype(jnp.float32)
    if bp != B:
        x = jnp.pad(x, ((0, bp - B), (0, 0)))   # row pad only (elided entirely when aligned)
    # NOTE: padded batch rows are not zero after fc1 (relu(b1) propagates through them);
    # safe only because they are sliced off below -- never reduce over batch in-kernel.

    grid = (bp // tb,)
    flops = 2 * bp * (state_size * LANE + 2 * LANE * LANE)
    bytes_accessed = 4 * (x.size + w1_p.size + w23_p.size + b_p.size) \
        + bp * LANE * jnp.dtype(out_dtype).itemsize

    out_p = pl.pallas_call(
        _dqn_kernel,
        out_shape=jax.ShapeDtypeStruct((bp, LANE), out_dtype),
        grid_spec=pltpu.PrefetchScalarGridSpec(
            num_scalar_prefetch=0,
            grid=grid,
            in_specs=[
                pl.BlockSpec((tb, state_size), lambda i: (i, 0)),     # x, batch-tiled
                pl.BlockSpec((state_size, LANE), lambda i: (0, 0)),   # w1 (resident)
                pl.BlockSpec((2, LANE, LANE), lambda i: (0, 0, 0)),   # [w2 | w3] (resident)
                pl.BlockSpec((3, LANE), lambda i: (0, 0)),            # biases (resident)
            ],
            out_specs=pl.BlockSpec((tb, LANE), lambda i: (i, 0)),
        ),
        compiler_params=pltpu.CompilerParams(
            dimension_semantics=("parallel",)),
        cost_estimate=pl.CostEstimate(
            flops=int(flops), transcendentals=0, bytes_accessed=int(bytes_accessed)),
    )(x, w1_p, w23_p, b_p)

    return out_p[:B, :action_size]


@functools.partial(jax.jit, static_argnames=("action_size", "out_dtype"))
def dqn_forward_stacked(state, stacked_packed, *, action_size, out_dtype=jnp.float32):
    """Run N stacked parameter sets (e.g. online + target) over one batch in ONE pallas_call.

    state: (B, state_size); stacked_packed: stack_packed_params([...]) of N sets.
    Returns (N, B, action_size).
    """
    w1_s, w23_s, b_s = stacked_packed
    N = w1_s.shape[0]
    B, state_size = state.shape
    assert w1_s.shape[1] == state_size, "state width does not match packed params"

    bp, tb = _batch_tiling(B)
    x = state.astype(jnp.float32)
    if bp != B:
        x = jnp.pad(x, ((0, bp - B), (0, 0)))

    grid = (N, bp // tb)
    flops = 2 * N * bp * (state_size * LANE + 2 * LANE * LANE)
    bytes_accessed = 4 * (x.size + w1_s.size + w23_s.size + b_s.size) \
        + N * bp * LANE * jnp.dtype(out_dtype).itemsize

    out_p = pl.pallas_call(
        _dqn_kernel_stacked,
        out_shape=jax.ShapeDtypeStruct((N, bp, LANE), out_dtype),
        grid_spec=pltpu.PrefetchScalarGridSpec(
            num_scalar_prefetch=0,
            grid=grid,
            in_specs=[
                pl.BlockSpec((tb, state_size), lambda n, i: (i, 0)),        # x (shared)
                pl.BlockSpec((1, state_size, LANE), lambda n, i: (n, 0, 0)),
                pl.BlockSpec((1, 2, LANE, LANE), lambda n, i: (n, 0, 0, 0)),
                pl.BlockSpec((1, 3, LANE), lambda n, i: (n, 0, 0)),
            ],
            out_specs=pl.BlockSpec((1, tb, LANE), lambda n, i: (n, i, 0)),
        ),
        compiler_params=pltpu.CompilerParams(
            dimension_semantics=("parallel", "parallel")),
        cost_estimate=pl.CostEstimate(
            flops=int(flops), transcendentals=0, bytes_accessed=int(bytes_accessed)),
    )(x, w1_s, w23_s, b_s)

    return out_p[:, :B, :action_size]


# ---------------------------------------------------------------------------
# Init / reference / test
# ---------------------------------------------------------------------------

def init_dqn_params(key, state_size, action_size, hidden=24):
    """Deterministic init mimicking torch.nn.Linear default (U[-1/sqrt(fan_in), +])."""
    def linear(k, fan_in, fan_out):
        kw, kb = jax.random.split(k)
        bound = 1.0 / jnp.sqrt(fan_in)
        w = jax.random.uniform(kw, (fan_in, fan_out), jnp.float32, -bound, bound)
        b = jax.random.uniform(kb, (fan_out,), jnp.float32, -bound, bound)
        return w, b

    k1, k2, k3 = jax.random.split(key, 3)
    w1, b1 = linear(k1, state_size, hidden)
    w2, b2 = linear(k2, hidden, hidden)
    w3, b3 = linear(k3, hidden, action_size)
    return (w1, b1, w2, b2, w3, b3)


def dqn_reference(state, params):
    w1, b1, w2, b2, w3, b3 = params
    x = jnp.maximum(state @ w1 + b1, 0.0)
    x = jnp.maximum(x @ w2 + b2, 0.0)
    return x @ w3 + b3


if __name__ == "__main__":
    key = jax.random.PRNGKey(0)
    k_online, k_target, k_small, k_big = jax.random.split(key, 4)

    STATE_SIZE = 4    # e.g. CartPole observation dim
    ACTION_SIZE = 2   # e.g. CartPole action dim

    online = init_dqn_params(k_online, STATE_SIZE, ACTION_SIZE)
    target = init_dqn_params(k_target, STATE_SIZE, ACTION_SIZE)
    online_p = pack_dqn_params(online)   # packed once, outside the per-step path
    target_p = pack_dqn_params(target)

    # 1) tiny act() batch, f32, single un-padded grid step
    state_small = jax.random.normal(k_small, (2, STATE_SIZE), jnp.float32)
    q_small = jax.block_until_ready(
        dqn_forward(state_small, online_p, action_size=ACTION_SIZE))
    assert q_small.shape == (2, ACTION_SIZE)
    assert jnp.allclose(q_small, dqn_reference(state_small, online),
                        atol=1e-5, rtol=1e-5), "small-batch mismatch vs reference"

    # 2) replay-sized batch (exercises row padding + even multi-tile grid), f32
    state_big = jax.random.normal(k_big, (100, STATE_SIZE), jnp.float32)
    q_big = jax.block_until_ready(
        dqn_forward(state_big, online_p, action_size=ACTION_SIZE))
    assert q_big.shape == (100, ACTION_SIZE)
    assert jnp.allclose(q_big, dqn_reference(state_big, online),
                        atol=1e-5, rtol=1e-5), "large-batch mismatch vs reference"

    # 3) bf16 output store (halves the dominant HBM write stream); compute stays f32
    q_bf16 = jax.block_until_ready(
        dqn_forward(state_big, online_p, action_size=ACTION_SIZE, out_dtype=jnp.bfloat16))
    assert q_bf16.dtype == jnp.bfloat16
    assert jnp.allclose(q_bf16.astype(jnp.float32), dqn_reference(state_big, online),
                        atol=3e-2, rtol=3e-2), "bf16-output mismatch vs reference"

    # 4) fused online + target forward in ONE pallas_call
    stacked = stack_packed_params([online_p, target_p])
    q_pair = jax.block_until_ready(
        dqn_forward_stacked(state_big, stacked, action_size=ACTION_SIZE))
    assert q_pair.shape == (2, 100, ACTION_SIZE)
    assert jnp.allclose(q_pair[0], dqn_reference(state_big, online),
                        atol=1e-5, rtol=1e-5), "stacked online mismatch"
    assert jnp.allclose(q_pair[1], dqn_reference(state_big, target),
                        atol=1e-5, rtol=1e-5), "stacked target mismatch"

    print("KERNEL_OK")
</pallas_src>

<mosaic_0001>
module attributes {stable_mosaic.version = 11 : i64} {
  func.func @_dqn_kernel(%arg0: i32, %arg1: memref<2x4xf32, #tpu.memory_space<vmem>>, %arg2: memref<4x128xf32, #tpu.memory_space<vmem>>, %arg3: memref<2x128x128xf32, #tpu.memory_space<vmem>>, %arg4: memref<3x128xf32, #tpu.memory_space<vmem>>, %arg5: memref<2x128xf32, #tpu.memory_space<vmem>>) attributes {dimension_semantics = [#tpu.dimension_semantics<parallel>], iteration_bounds = array<i64: 1>, scalar_prefetch = 0 : i64, scratch_operands = 0 : i64, tpu.core_type = #tpu.core_type<tc>, window_params = [{transform_indices = @transform_0, window_bounds = array<i64: 2, 4>}, {pipeline_mode = #tpu.pipeline_mode<synchronous>, transform_indices = @transform_1, window_bounds = array<i64: 4, 128>}, {pipeline_mode = #tpu.pipeline_mode<synchronous>, transform_indices = @transform_2, window_bounds = array<i64: 2, 128, 128>}, {pipeline_mode = #tpu.pipeline_mode<synchronous>, transform_indices = @transform_3, window_bounds = array<i64: 3, 128>}, {transform_indices = @transform_4, window_bounds = array<i64: 2, 128>}]} {
    %c0 = arith.constant 0 : index
    %c0_0 = arith.constant 0 : index
    %0 = vector.load %arg1[%c0, %c0_0] : memref<2x4xf32, #tpu.memory_space<vmem>>, vector<2x4xf32>
    %c0_1 = arith.constant 0 : index
    %c0_2 = arith.constant 0 : index
    %1 = vector.load %arg2[%c0_1, %c0_2] : memref<4x128xf32, #tpu.memory_space<vmem>>, vector<4x128xf32>
    %c0_3 = arith.constant 0 : index
    %c0_4 = arith.constant 0 : index
    %c0_5 = arith.constant 0 : index
    %2 = vector.load %arg3[%c0_3, %c0_4, %c0_5] : memref<2x128x128xf32, #tpu.memory_space<vmem>>, vector<2x128x128xf32>
    %c0_6 = arith.constant 0 : index
    %c0_7 = arith.constant 0 : index
    %3 = vector.load %arg4[%c0_6, %c0_7] : memref<3x128xf32, #tpu.memory_space<vmem>>, vector<3x128xf32>
    %cst = arith.constant dense<0.000000e+00> : vector<2x128xf32>
    %4 = tpu.matmul %0, %1, %cst {dimension_numbers = #tpu.dot_dimension_numbers<[1], [0], [0], [1], [0, 0, 1, 1], [], []>} : vector<2x4xf32>, vector<4x128xf32>, vector<2x128xf32> -> vector<2x128xf32>
    %5 = vector.extract_strided_slice %3 {offsets = [0, 0], sizes = [1, 128], strides = [1, 1]} : vector<3x128xf32> to vector<1x128xf32>
    %6 = vector.broadcast %5 : vector<1x128xf32> to vector<2x128xf32>
    %7 = arith.addf %4, %6 : vector<2x128xf32>
    %cst_8 = arith.constant 0.000000e+00 : f32
    %8 = vector.broadcast %cst_8 : f32 to vector<2x128xf32>
    %9 = arith.maximumf %7, %8 : vector<2x128xf32>
    %10 = vector.extract_strided_slice %2 {offsets = [0, 0, 0], sizes = [1, 128, 128], strides = [1, 1, 1]} : vector<2x128x128xf32> to vector<1x128x128xf32>
    %11 = vector.shape_cast %10 : vector<1x128x128xf32> to vector<128x128xf32>
    %cst_9 = arith.constant dense<0.000000e+00> : vector<2x128xf32>
    %12 = tpu.matmul %9, %11, %cst_9 {dimension_numbers = #tpu.dot_dimension_numbers<[1], [0], [0], [1], [0, 0, 1, 1], [], []>} : vector<2x128xf32>, vector<128x128xf32>, vector<2x128xf32> -> vector<2x128xf32>
    %13 = vector.extract_strided_slice %3 {offsets = [1, 0], sizes = [1, 128], strides = [1, 1]} : vector<3x128xf32> to vector<1x128xf32>
    %14 = vector.broadcast %13 : vector<1x128xf32> to vector<2x128xf32>
    %15 = arith.addf %12, %14 : vector<2x128xf32>
    %cst_10 = arith.constant 0.000000e+00 : f32
    %16 = vector.broadcast %cst_10 : f32 to vector<2x128xf32>
    %17 = arith.maximumf %15, %16 : vector<2x128xf32>
    %18 = vector.extract_strided_slice %2 {offsets = [1, 0, 0], sizes = [1, 128, 128], strides = [1, 1, 1]} : vector<2x128x128xf32> to vector<1x128x128xf32>
    %19 = vector.shape_cast %18 : vector<1x128x128xf32> to vector<128x128xf32>
    %cst_11 = arith.constant dense<0.000000e+00> : vector<2x128xf32>
    %20 = tpu.matmul %17, %19, %cst_11 {dimension_numbers = #tpu.dot_dimension_numbers<[1], [0], [0], [1], [0, 0, 1, 1], [], []>} : vector<2x128xf32>, vector<128x128xf32>, vector<2x128xf32> -> vector<2x128xf32>
    %21 = vector.extract_strided_slice %3 {offsets = [2, 0], sizes = [1, 128], strides = [1, 1]} : vector<3x128xf32> to vector<1x128xf32>
    %22 = vector.broadcast %21 : vector<1x128xf32> to vector<2x128xf32>
    %23 = arith.addf %20, %22 : vector<2x128xf32>
    %c0_12 = arith.constant 0 : index
    %c0_13 = arith.constant 0 : index
    %24 = vector.load %arg5[%c0_12, %c0_13] : memref<2x128xf32, #tpu.memory_space<vmem>>, vector<2x128xf32>
    tpu.vector_store %arg5[%c0_12, %c0_13], %23 {strides = array<i32>} : memref<2x128xf32, #tpu.memory_space<vmem>>, vector<2x128xf32>,
    return
  }
  func.func @transform_0(%arg0: i32) -> (i32, i32) {
    %c0_i32 = arith.constant 0 : i32
    %c0_i32_0 = arith.constant 0 : i32
    return %arg0, %c0_i32 : i32, i32
  }
  func.func @transform_1(%arg0: i32) -> (i32, i32) {
    %c0_i32 = arith.constant 0 : i32
    %c0_i32_0 = arith.constant 0 : i32
    %c0_i32_1 = arith.constant 0 : i32
    return %c0_i32, %c0_i32_0 : i32, i32
  }
  func.func @transform_2(%arg0: i32) -> (i32, i32, i32) {
    %c0_i32 = arith.constant 0 : i32
    %c0_i32_0 = arith.constant 0 : i32
    %c0_i32_1 = arith.constant 0 : i32
    %c0_i32_2 = arith.constant 0 : i32
    return %c0_i32, %c0_i32_0, %c0_i32_1 : i32, i32, i32
  }
  func.func @transform_3(%arg0: i32) -> (i32, i32) {
    %c0_i32 = arith.constant 0 : i32
    %c0_i32_0 = arith.constant 0 : i32
    %c0_i32_1 = arith.constant 0 : i32
    return %c0_i32, %c0_i32_0 : i32, i32
  }
  func.func @transform_4(%arg0: i32) -> (i32, i32) {
    %c0_i32 = arith.constant 0 : i32
    %c0_i32_0 = arith.constant 0 : i32
    return %arg0, %c0_i32 : i32, i32
  }
}

</mosaic_0001>

<llo_original>
// kernel: dqn_forward.1
$region0: #{dqn_forward.1}
  #allocation0 [shape = 'u32[]', space=smem, size = 0x4, offset = 0x4, fixed_abs, tag = 'smem constant byte address 0x4 - core index']
  #allocation1 [shape = 'u32[144,128]{1,0:T(1,128)}', space=vmem, size = 0x12000, scoped, tag = 'internal scratch']
  %s0 = inlined_call_operand.hbm [shape: f32[2,4], index: 0, kind: input, shape index: {}]
  %s1 = inlined_call_operand.hbm [shape: f32[4,128], index: 1, kind: input, shape index: {}]
  %s2 = inlined_call_operand.hbm [shape: f32[2,128,128], index: 2, kind: input, shape index: {}]
  %s3 = inlined_call_operand.vmem [shape: f32[3,128], index: 3, kind: input, shape index: {}]
  %s4 = inlined_call_operand.hbm [shape: f32[2,128], index: 4, kind: output, shape index: {}]
  %s5 = sld [smem:[#allocation0]]
  $region38: #{dqn_forward.1} parent=0
    _
  %s7 = ssub.s32 1, %s5
  %s8 = scalar_select 0, %s7, %s5
  $region1: #{dqn_forward.1} parent=0
    #allocation2 [shape = 'u8[1024]{0}', space=vmem, size = 0x400, scoped, tag = 'input window, operand 0, single buffered']
    #allocation3 [shape = 's32[1]{0}', space=sflag, size = 0x4, scoped, tag = 'scoped memory for dqn_forward.1']
    #allocation4 [shape = 's32[1]{0}', space=sflag, size = 0x4, scoped, tag = 'scoped memory for dqn_forward.1']
    #allocation5 [shape = 'u8[2048]{0}', space=vmem, size = 0x800, scoped, tag = 'input window, operand 1, single buffered']
    #allocation6 [shape = 's32[1]{0}', space=sflag, size = 0x4, scoped, tag = 'scoped memory for dqn_forward.1']
    #allocation7 [shape = 'u8[131072]{0}', space=vmem, size = 0x20000, scoped, tag = 'input window, operand 2, single buffered']
    #allocation8 [shape = 'u8[1024]{0}', space=vmem, size = 0x400, scoped, tag = 'output window, operand 0, single buffered']
    %9 = vsyncpa [#allocation3], 0
    %10 = vsyncpa [#allocation6], 0
    %11 = vsyncpa [#allocation4], 0
    // Predicated region
    $region2: #{dqn_forward.1} parent=1 // pred_check
      _
    $region3: #{dqn_forward.1} parent=1 // pred_check_branch
      %13 = sbr.rel (0) target = $region5
    $region4: #{dqn_forward.1} parent=1 // pred_region
      %s15 = ssub.s32 32, 32
      %16 = vsyncadd [#allocation3], %s15
      %s18 = sshll.u32 [#allocation2], 4
      %s19 = int_to_ptr.vmem [resolvable:$true] %s18
      %21 = dma.hbm_to_vmem [thread:$0]  %s0, 32, %s19, [#allocation3]
    $region5: #{dqn_forward.1} parent=1 // pred_fallthru
      _
    // Predicated region
    $region6: #{dqn_forward.1} parent=1 // pred_check
      _
    $region7: #{dqn_forward.1} parent=1 // pred_check_branch
      %23 = sbr.rel (0) target = $region9
    $region8: #{dqn_forward.1} parent=1 // pred_region
      %s25 = ssub.s32 64, 64
      %26 = vsyncadd [#allocation6], %s25
      %s28 = sshll.u32 [#allocation5], 4
      %s29 = int_to_ptr.vmem [resolvable:$true] %s28
      %31 = dma.hbm_to_vmem [thread:$0]  %s1, 64, %s29, [#allocation6]
    $region9: #{dqn_forward.1} parent=1 // pred_fallthru
      _
    // Predicated region
    $region10: #{dqn_forward.1} parent=1 // pred_check
      _
    $region11: #{dqn_forward.1} parent=1 // pred_check_branch
      %33 = sbr.rel (0) target = $region13
    $region12: #{dqn_forward.1} parent=1 // pred_region
      %s35 = ssub.s32 4096, 4096
      %36 = vsyncadd [#allocation6], %s35
      %s37 = sshll.u32 [#allocation7], 4
      %s38 = int_to_ptr.vmem [resolvable:$true] %s37
      %43 = dma.hbm_to_vmem [thread:$0]  %s2, 4096, %s38, [#allocation6], 128, 128, 8
    $region13: #{dqn_forward.1} parent=1 // pred_fallthru
      _
    // Predicated region
    $region14: #{dqn_forward.1} parent=1 // pred_check
      _
    $region15: #{dqn_forward.1} parent=1 // pred_check_branch
      %45 = sbr.rel (0) target = $region17
    $region16: #{dqn_forward.1} parent=1 // pred_region
      _
    $region17: #{dqn_forward.1} parent=1 // pred_fallthru
      _
    // Predicated region
    $region18: #{dqn_forward.1} parent=1 // pred_check
      _
    $region19: #{dqn_forward.1} parent=1 // pred_check_branch
      %47 = sbr.rel (0) target = $region21
    $region20: #{dqn_forward.1} parent=1 // pred_region
      %48 = dma.done [#allocation3], 32
    $region21: #{dqn_forward.1} parent=1 // pred_fallthru
      _
    // Predicated region
    $region22: #{dqn_forward.1} parent=1 // pred_check
      _
    $region23: #{dqn_forward.1} parent=1 // pred_check_branch
      %50 = sbr.rel (0) target = $region25
    $region24: #{dqn_forward.1} parent=1 // pred_region
      %51 = dma.done [#allocation6], 64
    $region25: #{dqn_forward.1} parent=1 // pred_fallthru
      _
    // Predicated region
    $region26: #{dqn_forward.1} parent=1 // pred_check
      _
    $region27: #{dqn_forward.1} parent=1 // pred_check_branch
      %53 = sbr.rel (0) target = $region29
    $region28: #{dqn_forward.1} parent=1 // pred_region
      %54 = dma.done [#allocation6], 4096
    $region29: #{dqn_forward.1} parent=1 // pred_fallthru
      _
    %v55 = vld [vmem:[#allocation2] sm:$0x3]
    %v56 = vld [vmem:[#allocation5] sm:$0xf]
    %v57 = vld [vmem:[#allocation7] sm:$0xff]
    %v58 = vld [vmem:[#allocation7 + $0x8] sm:$0xff]
    %v59 = vld [vmem:[#allocation7 + $0x10] sm:$0xff]
    %v60 = vld [vmem:[#allocation7 + $0x18] sm:$0xff]
    %v61 = vld [vmem:[#allocation7 + $0x20] sm:$0xff]
    %v62 = vld [vmem:[#allocation7 + $0x28] sm:$0xff]
    %v63 = vld [vmem:[#allocation7 + $0x30] sm:$0xff]
    %v64 = vld [vmem:[#allocation7 + $0x38] sm:$0xff]
    %v65 = vld [vmem:[#allocation7 + $0x40] sm:$0xff]
    %v66 = vld [vmem:[#allocation7 + $0x48] sm:$0xff]
    %v67 = vld [vmem:[#allocation7 + $0x50] sm:$0xff]
    %v68 = vld [vmem:[#allocation7 + $0x58] sm:$0xff]
    %v69 = vld [vmem:[#allocation7 + $0x60] sm:$0xff]
    %v70 = vld [vmem:[#allocation7 + $0x68] sm:$0xff]
    %v71 = vld [vmem:[#allocation7 + $0x70] sm:$0xff]
    %v72 = vld [vmem:[#allocation7 + $0x78] sm:$0xff]
    %v73 = vld [vmem:[#allocation7 + $0x80] sm:$0xff]
    %v74 = vld [vmem:[#allocation7 + $0x88] sm:$0xff]
    %v75 = vld [vmem:[#allocation7 + $0x90] sm:$0xff]
    %v76 = vld [vmem:[#allocation7 + $0x98] sm:$0xff]
    %v77 = vld [vmem:[#allocation7 + $0xa0] sm:$0xff]
    %v78 = vld [vmem:[#allocation7 + $0xa8] sm:$0xff]
    %v79 = vld [vmem:[#allocation7 + $0xb0] sm:$0xff]
    %v80 = vld [vmem:[#allocation7 + $0xb8] sm:$0xff]
    %v81 = vld [vmem:[#allocation7 + $0xc0] sm:$0xff]
    %v82 = vld [vmem:[#allocation7 + $0xc8] sm:$0xff]
    %v83 = vld [vmem:[#allocation7 + $0xd0] sm:$0xff]
    %v84 = vld [vmem:[#allocation7 + $0xd8] sm:$0xff]
    %v85 = vld [vmem:[#allocation7 + $0xe0] sm:$0xff]
    %v86 = vld [vmem:[#allocation7 + $0xe8] sm:$0xff]
    %v87 = vld [vmem:[#allocation7 + $0xf0] sm:$0xff]
    %v88 = vld [vmem:[#allocation7 + $0xf8] sm:$0xff]
    %v89 = vld [vmem:[%s3] sm:$0x7]
    %v90 = vlaneseq
    %v91 = vshrl.u32 %v90, 7
    %v92 = vsub.s32 0, %v91
    %v93 = vrot.slane %v89, %v92
    %vm94 = vcmask 31744
    %v96 = vsel %vm94, %v55, 0
    %vm98 = vcmask 1043456
    %v100 = vsel %vm98, %v56, 0
    %102 = vmatprep.subr.mxu0 0.0
    %103 = vmatpush1.msra.mxu0 %v100
    %104 = vmatprep.subr.mxu0 0.0
    %105 = vmatpush1.msra.mxu0 0.0
    %106 = vmatprep.subr.mxu0 0.0
    %107 = vmatpush1.msra.mxu0 0.0
    %108 = vmatprep.subr.mxu0 0.0
    %109 = vmatpush1.msra.mxu0 0.0
    %110 = vmatprep.subr.mxu0 0.0
    %111 = vmatpush1.msra.mxu0 0.0
    %112 = vmatprep.subr.mxu0 0.0
    %113 = vmatpush1.msra.mxu0 0.0
    %114 = vmatprep.subr.mxu0 0.0
    %115 = vmatpush1.msra.mxu0 0.0
    %116 = vmatprep.subr.mxu0 0.0
    %117 = vmatpush1.msra.mxu0 0.0
    %118 = vmatprep.subr.mxu0 0.0
    %119 = vmatpush1.msra.mxu0 0.0
    %120 = vmatprep.subr.mxu0 0.0
    %121 = vmatpush1.msra.mxu0 0.0
    %122 = vmatprep.subr.mxu0 0.0
    %123 = vmatpush1.msra.mxu0 0.0
    %124 = vmatprep.subr.mxu0 0.0
    %125 = vmatpush1.msra.mxu0 0.0
    %126 = vmatprep.subr.mxu0 0.0
    %127 = vmatpush1.msra.mxu0 0.0
    %128 = vmatprep.subr.mxu0 0.0
    %129 = vmatpush1.msra.mxu0 0.0
    %130 = vmatprep.subr.mxu0 0.0
    %131 = vmatpush1.msra.mxu0 0.0
    %132 = vmatprep.subr.mxu0 0.0
    %133 = vmatpush1.msra.mxu0 0.0
    %134 = vmatprep.subr.mxu0 0.0
    %135 = vmatpush1.msra.mxu0 0.0
    %136 = vmatprep.subr.mxu0 0.0
    %137 = vmatpush1.msra.mxu0 0.0
    %138 = vmatprep.subr.mxu0 0.0
    %139 = vmatpush1.msra.mxu0 0.0
    %140 = vmatprep.subr.mxu0 0.0
    %141 = vmatpush1.msra.mxu0 0.0
    %142 = vmatprep.subr.mxu0 0.0
    %143 = vmatpush1.msra.mxu0 0.0
    %144 = vmatprep.subr.mxu0 0.0
    %145 = vmatpush1.msra.mxu0 0.0
    %146 = vmatprep.subr.mxu0 0.0
    %147 = vmatpush1.msra.mxu0 0.0
    %148 = vmatprep.subr.mxu0 0.0
    %149 = vmatpush1.msra.mxu0 0.0
    %150 = vmatprep.subr.mxu0 0.0
    %151 = vmatpush1.msra.mxu0 0.0
    %152 = vmatprep.subr.mxu0 0.0
    %153 = vmatpush1.msra.mxu0 0.0
    %154 = vmatprep.subr.mxu0 0.0
    %155 = vmatpush1.msra.mxu0 0.0
    %156 = vmatprep.subr.mxu0 0.0
    %157 = vmatpush1.msra.mxu0 0.0
    %158 = vmatprep.subr.mxu0 0.0
    %159 = vmatpush1.msra.mxu0 0.0
    %160 = vmatprep.subr.mxu0 0.0
    %161 = vmatpush1.msra.mxu0 0.0
    %162 = vmatprep.subr.mxu0 0.0
    %163 = vmatpush1.msra.mxu0 0.0
    %164 = vmatprep.subr.mxu0 0.0
    %165 = vmatpush1.msra.mxu0 0.0
    %166 = vmatprep.mubr.f32.mxu0 0.0
    %167 = vmatmul.mubr.f32.gmra.mrb[0].mxu0 %v96
    %v168 = vpop.f32.mrb[0].mxu0
    %v169 = vadd.f32 %v93, %v168
    %v170 = vpop.f32.mrb[0].mxu0
    %171 = vdwg.mxu0
    %v172 = vmax.f32 %v169, 0.0
    %v173 = vlaneseq
    %v174 = vshrl.u32 %v173, 7
    %v175 = vsub.s32 1, %v174
    %v176 = vrot.slane %v89, %v175
    %177 = vmatprep.subr.mxu0 0.0
    %178 = vmatpush1.msra.mxu0 %v57
    %179 = vmatprep.subr.mxu0 0.0
    %180 = vmatpush1.msra.mxu0 %v58
    %181 = vmatprep.subr.mxu0 0.0
    %182 = vmatpush1.msra.mxu0 %v59
    %183 = vmatprep.subr.mxu0 0.0
    %184 = vmatpush1.msra.mxu0 %v60
    %185 = vmatprep.subr.mxu0 0.0
    %186 = vmatpush1.msra.mxu0 %v61
    %187 = vmatprep.subr.mxu0 0.0
    %188 = vmatpush1.msra.mxu0 %v62
    %189 = vmatprep.subr.mxu0 0.0
    %190 = vmatpush1.msra.mxu0 %v63
    %191 = vmatprep.subr.mxu0 0.0
    %192 = vmatpush1.msra.mxu0 %v64
    %193 = vmatprep.subr.mxu0 0.0
    %194 = vmatpush1.msra.mxu0 %v65
    %195 = vmatprep.subr.mxu0 0.0
    %196 = vmatpush1.msra.mxu0 %v66
    %197 = vmatprep.subr.mxu0 0.0
    %198 = vmatpush1.msra.mxu0 %v67
    %199 = vmatprep.subr.mxu0 0.0
    %200 = vmatpush1.msra.mxu0 %v68
    %201 = vmatprep.subr.mxu0 0.0
    %202 = vmatpush1.msra.mxu0 %v69
    %203 = vmatprep.subr.mxu0 0.0
    %204 = vmatpush1.msra.mxu0 %v70
    %205 = vmatprep.subr.mxu0 0.0
    %206 = vmatpush1.msra.mxu0 %v71
    %207 = vmatprep.subr.mxu0 0.0
    %208 = vmatpush1.msra.mxu0 %v72
    %209 = vmatprep.subr.mxu0 0.0
    %210 = vmatpush1.msra.mxu0 0.0
    %211 = vmatprep.subr.mxu0 0.0
    %212 = vmatpush1.msra.mxu0 0.0
    %213 = vmatprep.subr.mxu0 0.0
    %214 = vmatpush1.msra.mxu0 0.0
    %215 = vmatprep.subr.mxu0 0.0
    %216 = vmatpush1.msra.mxu0 0.0
    %217 = vmatprep.subr.mxu0 0.0
    %218 = vmatpush1.msra.mxu0 0.0
    %219 = vmatprep.subr.mxu0 0.0
    %220 = vmatpush1.msra.mxu0 0.0
    %221 = vmatprep.subr.mxu0 0.0
    %222 = vmatpush1.msra.mxu0 0.0
    %223 = vmatprep.subr.mxu0 0.0
    %224 = vmatpush1.msra.mxu0 0.0
    %225 = vmatprep.subr.mxu0 0.0
    %226 = vmatpush1.msra.mxu0 0.0
    %227 = vmatprep.subr.mxu0 0.0
    %228 = vmatpush1.msra.mxu0 0.0
    %229 = vmatprep.subr.mxu0 0.0
    %230 = vmatpush1.msra.mxu0 0.0
    %231 = vmatprep.subr.mxu0 0.0
    %232 = vmatpush1.msra.mxu0 0.0
    %233 = vmatprep.subr.mxu0 0.0
    %234 = vmatpush1.msra.mxu0 0.0
    %235 = vmatprep.subr.mxu0 0.0
    %236 = vmatpush1.msra.mxu0 0.0
    %237 = vmatprep.subr.mxu0 0.0
    %238 = vmatpush1.msra.mxu0 0.0
    %239 = vmatprep.subr.mxu0 0.0
    %240 = vmatpush1.msra.mxu0 0.0
    %241 = vmatprep.mubr.f32.mxu0 0.0
    %242 = vmatmul.mubr.f32.gmra.mrb[0].mxu0 %v172
    %v243 = vpop.f32.mrb[0].mxu0
    %v244 = vadd.f32 %v176, %v243
    %v245 = vpop.f32.mrb[0].mxu0
    %246 = vdwg.mxu0
    %v247 = vmax.f32 %v244, 0.0
    %v248 = vlaneseq
    %v249 = vshrl.u32 %v248, 7
    %v250 = vsub.s32 2, %v249
    %v251 = vrot.slane %v89, %v250
    %252 = vmatprep.subr.mxu0 0.0
    %253 = vmatpush1.msra.mxu0 %v73
    %254 = vmatprep.subr.mxu0 0.0
    %255 = vmatpush1.msra.mxu0 %v74
    %256 = vmatprep.subr.mxu0 0.0
    %257 = vmatpush1.msra.mxu0 %v75
    %258 = vmatprep.subr.mxu0 0.0
    %259 = vmatpush1.msra.mxu0 %v76
    %260 = vmatprep.subr.mxu0 0.0
    %261 = vmatpush1.msra.mxu0 %v77
    %262 = vmatprep.subr.mxu0 0.0
    %263 = vmatpush1.msra.mxu0 %v78
    %264 = vmatprep.subr.mxu0 0.0
    %265 = vmatpush1.msra.mxu0 %v79
    %266 = vmatprep.subr.mxu0 0.0
    %267 = vmatpush1.msra.mxu0 %v80
    %268 = vmatprep.subr.mxu0 0.0
    %269 = vmatpush1.msra.mxu0 %v81
    %270 = vmatprep.subr.mxu0 0.0
    %271 = vmatpush1.msra.mxu0 %v82
    %272 = vmatprep.subr.mxu0 0.0
    %273 = vmatpush1.msra.mxu0 %v83
    %274 = vmatprep.subr.mxu0 0.0
    %275 = vmatpush1.msra.mxu0 %v84
    %276 = vmatprep.subr.mxu0 0.0
    %277 = vmatpush1.msra.mxu0 %v85
    %278 = vmatprep.subr.mxu0 0.0
    %279 = vmatpush1.msra.mxu0 %v86
    %280 = vmatprep.subr.mxu0 0.0
    %281 = vmatpush1.msra.mxu0 %v87
    %282 = vmatprep.subr.mxu0 0.0
    %283 = vmatpush1.msra.mxu0 %v88
    %284 = vmatprep.subr.mxu0 0.0
    %285 = vmatpush1.msra.mxu0 0.0
    %286 = vmatprep.subr.mxu0 0.0
    %287 = vmatpush1.msra.mxu0 0.0
    %288 = vmatprep.subr.mxu0 0.0
    %289 = vmatpush1.msra.mxu0 0.0
    %290 = vmatprep.subr.mxu0 0.0
    %291 = vmatpush1.msra.mxu0 0.0
    %292 = vmatprep.subr.mxu0 0.0
    %293 = vmatpush1.msra.mxu0 0.0
    %294 = vmatprep.subr.mxu0 0.0
    %295 = vmatpush1.msra.mxu0 0.0
    %296 = vmatprep.subr.mxu0 0.0
    %297 = vmatpush1.msra.mxu0 0.0
    %298 = vmatprep.subr.mxu0 0.0
    %299 = vmatpush1.msra.mxu0 0.0
    %300 = vmatprep.subr.mxu0 0.0
    %301 = vmatpush1.msra.mxu0 0.0
    %302 = vmatprep.subr.mxu0 0.0
    %303 = vmatpush1.msra.mxu0 0.0
    %304 = vmatprep.subr.mxu0 0.0
    %305 = vmatpush1.msra.mxu0 0.0
    %306 = vmatprep.subr.mxu0 0.0
    %307 = vmatpush1.msra.mxu0 0.0
    %308 = vmatprep.subr.mxu0 0.0
    %309 = vmatpush1.msra.mxu0 0.0
    %310 = vmatprep.subr.mxu0 0.0
    %311 = vmatpush1.msra.mxu0 0.0
    %312 = vmatprep.subr.mxu0 0.0
    %313 = vmatpush1.msra.mxu0 0.0
    %314 = vmatprep.subr.mxu0 0.0
    %315 = vmatpush1.msra.mxu0 0.0
    %316 = vmatprep.mubr.f32.mxu0 0.0
    %317 = vmatmul.mubr.f32.gmra.mrb[0].mxu0 %v247
    %v318 = vpop.f32.mrb[0].mxu0
    %v319 = vadd.f32 %v251, %v318
    %v320 = vpop.f32.mrb[0].mxu0
    %321 = vdwg.mxu0
    %322 = vst [vmem:[#allocation8] sm:$0x3] %v319
    // Predicated region
    $region30: #{dqn_forward.1} parent=1 // pred_check
      _
    $region31: #{dqn_forward.1} parent=1 // pred_check_branch
      %324 = sbr.rel (0) target = $region33
    $region32: #{dqn_forward.1} parent=1 // pred_region
      %s326 = ssub.s32 32, 32
      %327 = vsyncadd [#allocation4], %s326
      %s329 = sshll.u32 [#allocation8], 4
      %s330 = int_to_ptr.vmem [resolvable:$true] %s329
      %332 = dma.vmem_to_hbm [thread:$0]  %s330, 32, %s4, [#allocation4]
    $region33: #{dqn_forward.1} parent=1 // pred_fallthru
      _
    // Predicated region
    $region34: #{dqn_forward.1} parent=1 // pred_check
      _
    $region35: #{dqn_forward.1} parent=1 // pred_check_branch
      %334 = sbr.rel (0) target = $region37
    $region36: #{dqn_forward.1} parent=1 // pred_region
      %335 = dma.done [#allocation4], 32
    $region37: #{dqn_forward.1} parent=1 // pred_fallthru
      _
    %336 = vsyncpa [#allocation3], 1
    %337 = vsyncpa [#allocation6], 1
    %338 = vsyncpa [#allocation4], 1

</llo_original>
